<compile_context>
chip_gen: v5e
topology: v5e:2x2
jax: 0.10.0
libtpu: 0.0.40
codegen_flags: <defaults>
</compile_context>

<pallas_src>
import jax
import jax.numpy as jnp
from jax.experimental import pallas as pl
from jax.experimental.pallas import tpu as pltpu


def _controller_kernel(xT_ref, w1_ref, b1_ref, w2_ref, b2_ref, pT_ref, oT_ref):
    # Weights arrive pre-cast (grid-resident) in the matmul dtype.
    w1 = w1_ref[...]                       # (H, F)
    w2 = w2_ref[...]                       # (O, H)

    # In-kernel cast of the streamed activation (no-op if dtypes already match).
    x = xT_ref[...].astype(w1.dtype)       # (F, tb)

    # h^T = sigmoid(W1 @ x^T + b1): MXU matmul, f32 accumulate; sigmoid on EUP.
    h = jnp.dot(w1, x, preferred_element_type=jnp.float32)      # (H, tb)
    h = jax.nn.sigmoid(h + b1_ref[...])                         # b1 (H,1) bcasts

    # y^T = W2 @ h^T + b2
    y = jnp.dot(w2, h.astype(w2.dtype), preferred_element_type=jnp.float32)
    y = y + b2_ref[...]                                          # (O, tb)

    # Gate with p^T and store lane-dense (batch on the lane axis).
    oT_ref[...] = (y * pT_ref[...].astype(jnp.float32)).astype(oT_ref.dtype)


def controller_net(x, p, w1, b1, w2, b2, *, block_b: int = 4096,
                   use_bf16_matmul: bool = False, out_dtype=jnp.float32):
    """Fused ControllerNet forward on TPU via Pallas.

    x  : [B, F]  (any float dtype; cast to f32/bf16 in-kernel, like x.to(float32))
    p  : [B, O]  elementwise gate
    w1 : [H, F], b1 : [H]   (nn.Linear layout: weight [out, in])
    w2 : [O, H], b2 : [O]
    returns [B, O] in `out_dtype` (default float32)
    """
    B, F = x.shape
    H, F2 = w1.shape
    O, H2 = w2.shape
    assert F2 == F and H2 == H and b1.shape == (H,) and b2.shape == (O,)
    assert p.shape == (B, O)

    # Wrapper-side layout plumbing: batch goes on the lane (last) axis.
    xT = x.T                                # (F, B)
    pT = p.T                                # (O, B)

    mm_dtype = jnp.bfloat16 if use_bf16_matmul else jnp.float32
    w1k = w1.astype(mm_dtype)               # grid-resident, cast once
    w2k = w2.astype(mm_dtype)
    b1k = b1.astype(jnp.float32).reshape(H, 1)
    b2k = b2.astype(jnp.float32).reshape(O, 1)

    # Batch tile on the lane axis. Small batches: one full-extent block
    # (allowed by the "equal to full array dim" rule). Large batches: a
    # multiple-of-128 tile sized so the grid has >= 2 steps (v7x 2 TCs).
    if B <= 256:
        tb = B
    else:
        tb = min(block_b, pl.cdiv(B, 2))
        tb = ((tb + 127) // 128) * 128
    grid_b = pl.cdiv(B, tb)

    out_itemsize = jnp.dtype(out_dtype).itemsize
    streamed = tb * (F * x.dtype.itemsize + O * p.dtype.itemsize + O * out_itemsize)
    resident = (H * F + O * H) * jnp.dtype(mm_dtype).itemsize + (H + O) * 4
    # Honest footprint: double-buffered streamed + resident + compiler slack.
    vmem_bytes = int(min(2 * streamed + 2 * resident + (4 << 20), 32 << 20))

    cost = pl.CostEstimate(
        flops=2 * B * (F * H + H * O),
        transcendentals=B * H,
        bytes_accessed=(B * F * x.dtype.itemsize
                        + B * O * p.dtype.itemsize
                        + resident
                        + B * O * out_itemsize),
    )

    outT = pl.pallas_call(
        _controller_kernel,
        out_shape=jax.ShapeDtypeStruct((O, B), out_dtype),
        grid_spec=pltpu.PrefetchScalarGridSpec(
            num_scalar_prefetch=0,
            grid=(grid_b,),
            in_specs=[
                pl.BlockSpec((F, tb), lambda i: (0, i)),   # x^T: streamed, lane-dense
                pl.BlockSpec((H, F), lambda i: (0, 0)),    # W1: resident
                pl.BlockSpec((H, 1), lambda i: (0, 0)),    # b1: resident
                pl.BlockSpec((O, H), lambda i: (0, 0)),    # W2: resident
                pl.BlockSpec((O, 1), lambda i: (0, 0)),    # b2: resident
                pl.BlockSpec((O, tb), lambda i: (0, i)),   # p^T: streamed, lane-dense
            ],
            out_specs=pl.BlockSpec((O, tb), lambda i: (0, i)),
        ),
        compiler_params=pltpu.CompilerParams(
            dimension_semantics=("parallel",),
            vmem_limit_bytes=vmem_bytes,
        ),
        cost_estimate=cost,
    )(xT, w1k, b1k, w2k, b2k, pT)

    # Back to the caller-visible [B, O] layout (tiny copy: B*O elements).
    return outT.T


def _reference(x, p, w1, b1, w2, b2):
    x = x.astype(jnp.float32)
    h = jax.nn.sigmoid(x @ w1.T + b1)
    return (h @ w2.T + b2) * p.astype(jnp.float32)


if __name__ == "__main__":
    # Deterministic synthetic parameters / inputs (no checkpoint loading).
    F, H, O = 16, 32, 8
    key = jax.random.PRNGKey(0)
    kx, kp, kw1, kb1, kw2, kb2, kx2, kp2 = jax.random.split(key, 8)

    # nn.Linear-style init (uniform in +/- 1/sqrt(fan_in)), weight layout [out, in].
    lim1 = 1.0 / (F ** 0.5)
    lim2 = 1.0 / (H ** 0.5)
    w1 = jax.random.uniform(kw1, (H, F), minval=-lim1, maxval=lim1, dtype=jnp.float32)
    b1 = jax.random.uniform(kb1, (H,),   minval=-lim1, maxval=lim1, dtype=jnp.float32)
    w2 = jax.random.uniform(kw2, (O, H), minval=-lim2, maxval=lim2, dtype=jnp.float32)
    b2 = jax.random.uniform(kb2, (O,),   minval=-lim2, maxval=lim2, dtype=jnp.float32)

    # --- Case 1: tiny batch (single full-extent block) ---
    B = 8
    x = jax.random.normal(kx, (B, F), dtype=jnp.float32)
    p = jax.random.normal(kp, (B, O), dtype=jnp.float32)

    y = controller_net(x, p, w1, b1, w2, b2)
    jax.block_until_ready(y)
    y_ref = _reference(x, p, w1, b1, w2, b2)
    assert y.shape == (B, O)
    assert jnp.allclose(y, y_ref, atol=1e-5, rtol=1e-5), "mismatch (small batch)"

    # --- Case 2: larger batch, bf16 x (in-kernel cast), multi-step grid with a
    # partial edge-masked tail block and no wrapper-side padding/slicing ---
    B2 = 1000  # not a multiple of the 512-row tile: exercises the masked tail
    x2 = jax.random.normal(kx2, (B2, F), dtype=jnp.bfloat16)
    p2 = jax.random.normal(kp2, (B2, O), dtype=jnp.float32)

    y2 = controller_net(x2, p2, w1, b1, w2, b2)
    jax.block_until_ready(y2)
    y2_ref = _reference(x2, p2, w1, b1, w2, b2)
    assert y2.shape == (B2, O)
    assert jnp.allclose(y2, y2_ref, atol=1e-5, rtol=1e-5), "mismatch (batched)"

    print("KERNEL_OK")
</pallas_src>

<mosaic_0001>
module attributes {stable_mosaic.version = 11 : i64} {
  func.func @_controller_kernel(%arg0: i32, %arg1: memref<16x8xf32, #tpu.memory_space<vmem>>, %arg2: memref<32x16xf32, #tpu.memory_space<vmem>>, %arg3: memref<32x1xf32, #tpu.memory_space<vmem>>, %arg4: memref<8x32xf32, #tpu.memory_space<vmem>>, %arg5: memref<8x1xf32, #tpu.memory_space<vmem>>, %arg6: memref<8x8xf32, #tpu.memory_space<vmem>>, %arg7: memref<8x8xf32, #tpu.memory_space<vmem>>) attributes {dimension_semantics = [#tpu.dimension_semantics<parallel>], iteration_bounds = array<i64: 1>, scalar_prefetch = 0 : i64, scratch_operands = 0 : i64, tpu.core_type = #tpu.core_type<tc>, window_params = [{transform_indices = @transform_0, window_bounds = array<i64: 16, 8>}, {pipeline_mode = #tpu.pipeline_mode<synchronous>, transform_indices = @transform_1, window_bounds = array<i64: 32, 16>}, {pipeline_mode = #tpu.pipeline_mode<synchronous>, transform_indices = @transform_2, window_bounds = array<i64: 32, 1>}, {pipeline_mode = #tpu.pipeline_mode<synchronous>, transform_indices = @transform_3, window_bounds = array<i64: 8, 32>}, {pipeline_mode = #tpu.pipeline_mode<synchronous>, transform_indices = @transform_4, window_bounds = array<i64: 8, 1>}, {transform_indices = @transform_5, window_bounds = array<i64: 8, 8>}, {transform_indices = @transform_6, window_bounds = array<i64: 8, 8>}]} {
    %c0 = arith.constant 0 : index
    %c0_0 = arith.constant 0 : index
    %0 = vector.load %arg2[%c0, %c0_0] : memref<32x16xf32, #tpu.memory_space<vmem>>, vector<32x16xf32>
    %c0_1 = arith.constant 0 : index
    %c0_2 = arith.constant 0 : index
    %1 = vector.load %arg4[%c0_1, %c0_2] : memref<8x32xf32, #tpu.memory_space<vmem>>, vector<8x32xf32>
    %c0_3 = arith.constant 0 : index
    %c0_4 = arith.constant 0 : index
    %2 = vector.load %arg1[%c0_3, %c0_4] : memref<16x8xf32, #tpu.memory_space<vmem>>, vector<16x8xf32>
    %cst = arith.constant dense<0.000000e+00> : vector<32x8xf32>
    %3 = tpu.matmul %0, %2, %cst {dimension_numbers = #tpu.dot_dimension_numbers<[1], [0], [0], [1], [0, 0, 1, 1], [], []>} : vector<32x16xf32>, vector<16x8xf32>, vector<32x8xf32> -> vector<32x8xf32>
    %c0_5 = arith.constant 0 : index
    %c0_6 = arith.constant 0 : index
    %4 = vector.load %arg3[%c0_5, %c0_6] : memref<32x1xf32, #tpu.memory_space<vmem>>, vector<32x1xf32>
    %5 = vector.broadcast %4 : vector<32x1xf32> to vector<32x8xf32>
    %6 = arith.addf %3, %5 : vector<32x8xf32>
    %7 = arith.negf %6 : vector<32x8xf32>
    %8 = math.exp %7 : vector<32x8xf32>
    %cst_7 = arith.constant 1.000000e+00 : f32
    %9 = vector.broadcast %cst_7 : f32 to vector<32x8xf32>
    %10 = arith.addf %9, %8 : vector<32x8xf32>
    %11 = arith.divf %9, %10 : vector<32x8xf32>
    %cst_8 = arith.constant dense<0.000000e+00> : vector<8x8xf32>
    %12 = tpu.matmul %1, %11, %cst_8 {dimension_numbers = #tpu.dot_dimension_numbers<[1], [0], [0], [1], [0, 0, 1, 1], [], []>} : vector<8x32xf32>, vector<32x8xf32>, vector<8x8xf32> -> vector<8x8xf32>
    %c0_9 = arith.constant 0 : index
    %c0_10 = arith.constant 0 : index
    %13 = vector.load %arg5[%c0_9, %c0_10] : memref<8x1xf32, #tpu.memory_space<vmem>>, vector<8x1xf32>
    %14 = vector.broadcast %13 : vector<8x1xf32> to vector<8x8xf32>
    %15 = arith.addf %12, %14 : vector<8x8xf32>
    %c0_11 = arith.constant 0 : index
    %c0_12 = arith.constant 0 : index
    %16 = vector.load %arg6[%c0_11, %c0_12] : memref<8x8xf32, #tpu.memory_space<vmem>>, vector<8x8xf32>
    %17 = arith.mulf %15, %16 : vector<8x8xf32>
    %c0_13 = arith.constant 0 : index
    %c0_14 = arith.constant 0 : index
    %18 = vector.load %arg7[%c0_13, %c0_14] : memref<8x8xf32, #tpu.memory_space<vmem>>, vector<8x8xf32>
    tpu.vector_store %arg7[%c0_13, %c0_14], %17 {strides = array<i32>} : memref<8x8xf32, #tpu.memory_space<vmem>>, vector<8x8xf32>,
    return
  }
  func.func @transform_0(%arg0: i32) -> (i32, i32) {
    %c0_i32 = arith.constant 0 : i32
    %c0_i32_0 = arith.constant 0 : i32
    return %c0_i32, %arg0 : i32, i32
  }
  func.func @transform_1(%arg0: i32) -> (i32, i32) {
    %c0_i32 = arith.constant 0 : i32
    %c0_i32_0 = arith.constant 0 : i32
    %c0_i32_1 = arith.constant 0 : i32
    return %c0_i32, %c0_i32_0 : i32, i32
  }
  func.func @transform_2(%arg0: i32) -> (i32, i32) {
    %c0_i32 = arith.constant 0 : i32
    %c0_i32_0 = arith.constant 0 : i32
    %c0_i32_1 = arith.constant 0 : i32
    return %c0_i32, %c0_i32_0 : i32, i32
  }
  func.func @transform_3(%arg0: i32) -> (i32, i32) {
    %c0_i32 = arith.constant 0 : i32
    %c0_i32_0 = arith.constant 0 : i32
    %c0_i32_1 = arith.constant 0 : i32
    return %c0_i32, %c0_i32_0 : i32, i32
  }
  func.func @transform_4(%arg0: i32) -> (i32, i32) {
    %c0_i32 = arith.constant 0 : i32
    %c0_i32_0 = arith.constant 0 : i32
    %c0_i32_1 = arith.constant 0 : i32
    return %c0_i32, %c0_i32_0 : i32, i32
  }
  func.func @transform_5(%arg0: i32) -> (i32, i32) {
    %c0_i32 = arith.constant 0 : i32
    %c0_i32_0 = arith.constant 0 : i32
    return %c0_i32, %arg0 : i32, i32
  }
  func.func @transform_6(%arg0: i32) -> (i32, i32) {
    %c0_i32 = arith.constant 0 : i32
    %c0_i32_0 = arith.constant 0 : i32
    return %c0_i32, %arg0 : i32, i32
  }
}

</mosaic_0001>

<llo_original>
// kernel: tpu_custom_call.1
$region0: #{tpu_custom_call.1}
  #allocation0 [shape = 'u32[]', space=smem, size = 0x4, offset = 0x4, fixed_abs, tag = 'smem constant byte address 0x4 - core index']
  #allocation1 [shape = 'u32[72,128]{1,0:T(1,128)}', space=vmem, size = 0x9000, scoped, tag = 'internal scratch']
  %s0 = inlined_call_operand.vmem [shape: f32[16,8], index: 0, kind: input, shape index: {}]
  %s1 = inlined_call_operand.vmem [shape: f32[32,16], index: 1, kind: input, shape index: {}]
  %s2 = inlined_call_operand.vmem [shape: f32[32,1], index: 2, kind: input, shape index: {}]
  %s3 = inlined_call_operand.vmem [shape: f32[8,32], index: 3, kind: input, shape index: {}]
  %s4 = inlined_call_operand.vmem [shape: f32[8,1], index: 4, kind: input, shape index: {}]
  %s5 = inlined_call_operand.vmem [shape: f32[8,8], index: 5, kind: input, shape index: {}]
  %s6 = inlined_call_operand.hbm [shape: f32[8,8], index: 6, kind: output, shape index: {}]
  %s7 = sld [smem:[#allocation0]]
  $region34: #{tpu_custom_call.1} parent=0
    _
  %s9 = ssub.s32 1, %s7
  %s10 = scalar_select 0, %s9, %s7
  $region1: #{tpu_custom_call.1} parent=0
    #allocation2 [shape = 'u8[4096]{0}', space=vmem, size = 0x1000, scoped, tag = 'output window, operand 0, single buffered']
    #allocation3 [shape = 's32[1]{0}', space=sflag, size = 0x4, scoped, tag = 'scoped memory for tpu_custom_call.1']
    %11 = vsyncpa [#allocation3], 0
    // Predicated region
    $region2: #{tpu_custom_call.1} parent=1 // pred_check
      _
    $region3: #{tpu_custom_call.1} parent=1 // pred_check_branch
      %13 = sbr.rel (0) target = $region5
    $region4: #{tpu_custom_call.1} parent=1 // pred_region
      _
    $region5: #{tpu_custom_call.1} parent=1 // pred_fallthru
      _
    // Predicated region
    $region6: #{tpu_custom_call.1} parent=1 // pred_check
      _
    $region7: #{tpu_custom_call.1} parent=1 // pred_check_branch
      %15 = sbr.rel (0) target = $region9
    $region8: #{tpu_custom_call.1} parent=1 // pred_region
      _
    $region9: #{tpu_custom_call.1} parent=1 // pred_fallthru
      _
    // Predicated region
    $region10: #{tpu_custom_call.1} parent=1 // pred_check
      _
    $region11: #{tpu_custom_call.1} parent=1 // pred_check_branch
      %17 = sbr.rel (0) target = $region13
    $region12: #{tpu_custom_call.1} parent=1 // pred_region
      _
    $region13: #{tpu_custom_call.1} parent=1 // pred_fallthru
      _
    // Predicated region
    $region14: #{tpu_custom_call.1} parent=1 // pred_check
      _
    $region15: #{tpu_custom_call.1} parent=1 // pred_check_branch
      %19 = sbr.rel (0) target = $region17
    $region16: #{tpu_custom_call.1} parent=1 // pred_region
      _
    $region17: #{tpu_custom_call.1} parent=1 // pred_fallthru
      _
    // Predicated region
    $region18: #{tpu_custom_call.1} parent=1 // pred_check
      _
    $region19: #{tpu_custom_call.1} parent=1 // pred_check_branch
      %21 = sbr.rel (0) target = $region21
    $region20: #{tpu_custom_call.1} parent=1 // pred_region
      _
    $region21: #{tpu_custom_call.1} parent=1 // pred_fallthru
      _
    // Predicated region
    $region22: #{tpu_custom_call.1} parent=1 // pred_check
      _
    $region23: #{tpu_custom_call.1} parent=1 // pred_check_branch
      %23 = sbr.rel (0) target = $region25
    $region24: #{tpu_custom_call.1} parent=1 // pred_region
      _
    $region25: #{tpu_custom_call.1} parent=1 // pred_fallthru
      _
    %v24 = vld [vmem:[%s1] sm:$0xff]
    %v25 = vld [vmem:[%s1 + $0x8] sm:$0xff]
    %v26 = vld [vmem:[%s1 + $0x10] sm:$0xff]
    %v27 = vld [vmem:[%s1 + $0x18] sm:$0xff]
    %v28 = vld [vmem:[%s3] sm:$0xff]
    %v29 = vld [vmem:[%s0] sm:$0xff]
    %v30 = vld [vmem:[%s0 + $0x8] sm:$0xff]
    %v31 = vld [vmem:[%s2] sm:$0xff]
    %v32 = vld [vmem:[%s2 + $0x8] sm:$0xff]
    %v33 = vld [vmem:[%s2 + $0x10] sm:$0xff]
    %v34 = vld [vmem:[%s2 + $0x18] sm:$0xff]
    %36 = vset.pattern.permute.xlu0 0
    %37 = vperm.xlu0 %36, %v31
    %v38 = vpop.permute.xlu0 %37
    %41 = vset.pattern.permute.xlu0 0
    %42 = vperm.xlu0 %41, %v32
    %v43 = vpop.permute.xlu0 %42
    %46 = vset.pattern.permute.xlu0 0
    %47 = vperm.xlu0 %46, %v33
    %v48 = vpop.permute.xlu0 %47
    %51 = vset.pattern.permute.xlu0 0
    %52 = vperm.xlu0 %51, %v34
    %v53 = vpop.permute.xlu0 %52
    %vm55 = vcmask 130048
    %v57 = vsel %vm55, %v24, 0
    %v60 = vsel %vm55, %v25, 0
    %v63 = vsel %vm55, %v26, 0
    %v66 = vsel %vm55, %v27, 0
    %68 = vmatpush.msra.mxu0 0.0
    %69 = vmatpush.msra.mxu0 0.0
    %70 = vmatpush.msra.mxu0 0.0
    %71 = vmatpush.msra.mxu0 0.0
    %72 = vmatpush.msra.mxu0 0.0
    %73 = vmatpush.msra.mxu0 0.0
    %74 = vmatpush.msra.mxu0 0.0
    %75 = vmatpush.msra.mxu0 0.0
    %76 = vmatpush.msra.mxu0 0.0
    %77 = vmatpush.msra.mxu0 0.0
    %78 = vmatpush.msra.mxu0 0.0
    %79 = vmatpush.msra.mxu0 0.0
    %80 = vmatpush.msra.mxu0 0.0
    %81 = vmatpush.msra.mxu0 0.0
    %82 = vmatpush.msra.mxu0 %v30
    %83 = vmatpush.msra.mxu0 %v29
    %84 = vmatmul.f32.gmra.mxu0 %v57
    %v85 = vpop.f32.mrf.mxu0
    %v86 = vadd.f32 %v38, %v85
    %87 = vmatmul.f32.gmra.mxu0 %v60
    %v88 = vpop.f32.mrf.mxu0
    %v89 = vadd.f32 %v43, %v88
    %90 = vmatmul.f32.gmra.mxu0 %v63
    %v91 = vpop.f32.mrf.mxu0
    %v92 = vadd.f32 %v48, %v91
    %93 = vmatmul.f32.gmra.mxu0 %v66
    %v94 = vpop.f32.mrf.mxu0
    %v95 = vadd.f32 %v53, %v94
    %96 = vdwg.mxu0
    %v97 = vxor.u32 %v86, 2147483648
    %v98 = vxor.u32 %v89, 2147483648
    %v99 = vxor.u32 %v92, 2147483648
    %v100 = vxor.u32 %v95, 2147483648
    %v101 = vmul.f32 %v97, 1.442695
    %v102 = vpow.pop %v101
    %v103 = vmul.f32 %v98, 1.442695
    %v104 = vpow.pop %v103
    %v105 = vmul.f32 %v99, 1.442695
    %v106 = vpow.pop %v105
    %v107 = vmul.f32 %v100, 1.442695
    %v108 = vpow.pop %v107
    %v109 = vadd.f32 %v102, 1.0
    %v110 = vadd.f32 %v104, 1.0
    %v111 = vadd.f32 %v106, 1.0
    %v112 = vadd.f32 %v108, 1.0
    %v113 = vrcp.pop %v109
    %v114 = vmul.f32 %v109, %v113
    %v115 = vsub.f32 1.0, %v114
    %v116 = vmul.f32 %v113, %v115
    %v117 = vadd.f32 %v113, %v116
    %vm118 = vweird.f32 %v109
    %vm119 = vweird.f32 %v113
    %vm120 = vmor %vm118, %vm119
    %v121 = vsel %vm120, %v113, %v117
    %v122 = vand.u32 2147483647, %v109
    %vm123 = vcmp.eq.f32.partialorder %v122, 8.507059e+37
    %v124 = vand.u32 %v109, 2147483648
    %v125 = vor.u32 1.1754944e-38, %v124
    %v126 = vsel %vm123, %v125, %v121
    %v127 = vmul.f32 1.0, %v126
    %v128 = vrcp.pop %v110
    %v129 = vmul.f32 %v110, %v128
    %v130 = vsub.f32 1.0, %v129
    %v131 = vmul.f32 %v128, %v130
    %v132 = vadd.f32 %v128, %v131
    %vm133 = vweird.f32 %v110
    %vm134 = vweird.f32 %v128
    %vm135 = vmor %vm133, %vm134
    %v136 = vsel %vm135, %v128, %v132
    %v137 = vand.u32 2147483647, %v110
    %vm138 = vcmp.eq.f32.partialorder %v137, 8.507059e+37
    %v139 = vand.u32 %v110, 2147483648
    %v140 = vor.u32 1.1754944e-38, %v139
    %v141 = vsel %vm138, %v140, %v136
    %v142 = vmul.f32 1.0, %v141
    %v143 = vrcp.pop %v111
    %v144 = vmul.f32 %v111, %v143
    %v145 = vsub.f32 1.0, %v144
    %v146 = vmul.f32 %v143, %v145
    %v147 = vadd.f32 %v143, %v146
    %vm148 = vweird.f32 %v111
    %vm149 = vweird.f32 %v143
    %vm150 = vmor %vm148, %vm149
    %v151 = vsel %vm150, %v143, %v147
    %v152 = vand.u32 2147483647, %v111
    %vm153 = vcmp.eq.f32.partialorder %v152, 8.507059e+37
    %v154 = vand.u32 %v111, 2147483648
    %v155 = vor.u32 1.1754944e-38, %v154
    %v156 = vsel %vm153, %v155, %v151
    %v157 = vmul.f32 1.0, %v156
    %v158 = vrcp.pop %v112
    %v159 = vmul.f32 %v112, %v158
    %v160 = vsub.f32 1.0, %v159
    %v161 = vmul.f32 %v158, %v160
    %v162 = vadd.f32 %v158, %v161
    %vm163 = vweird.f32 %v112
    %vm164 = vweird.f32 %v158
    %vm165 = vmor %vm163, %vm164
    %v166 = vsel %vm165, %v158, %v162
    %v167 = vand.u32 2147483647, %v112
    %vm168 = vcmp.eq.f32.partialorder %v167, 8.507059e+37
    %v169 = vand.u32 %v112, 2147483648
    %v170 = vor.u32 1.1754944e-38, %v169
    %v171 = vsel %vm168, %v170, %v166
    %v172 = vmul.f32 1.0, %v171
    %v173 = vld [vmem:[%s4] sm:$0xff]
    %175 = vset.pattern.permute.xlu0 0
    %176 = vperm.xlu0 %175, %v173
    %v177 = vpop.permute.xlu0 %176
    %vm179 = vcmask 261120
    %v181 = vsel %vm179, %v28, 0
    %183 = vmatpush.msra.mxu0 0.0
    %184 = vmatpush.msra.mxu0 0.0
    %185 = vmatpush.msra.mxu0 0.0
    %186 = vmatpush.msra.mxu0 0.0
    %187 = vmatpush.msra.mxu0 0.0
    %188 = vmatpush.msra.mxu0 0.0
    %189 = vmatpush.msra.mxu0 0.0
    %190 = vmatpush.msra.mxu0 0.0
    %191 = vmatpush.msra.mxu0 0.0
    %192 = vmatpush.msra.mxu0 0.0
    %193 = vmatpush.msra.mxu0 0.0
    %194 = vmatpush.msra.mxu0 0.0
    %195 = vmatpush.msra.mxu0 %v172
    %196 = vmatpush.msra.mxu0 %v157
    %197 = vmatpush.msra.mxu0 %v142
    %198 = vmatpush.msra.mxu0 %v127
    %199 = vmatmul.f32.gmra.mxu0 %v181
    %v200 = vpop.f32.mrf.mxu0
    %v201 = vadd.f32 %v177, %v200
    %202 = vdwg.mxu0
    %v203 = vld [vmem:[%s5] sm:$0xff]
    %v204 = vmul.f32 %v201, %v203
    %vm205 = vcmask 64512
    %206 = vst.msk [vmem:[#allocation2] sm:$0xff] %vm205, %v204
    // Predicated region
    $region26: #{tpu_custom_call.1} parent=1 // pred_check
      _
    $region27: #{tpu_custom_call.1} parent=1 // pred_check_branch
      %208 = sbr.rel (0) target = $region29
    $region28: #{tpu_custom_call.1} parent=1 // pred_region
      %210 = vsyncadd [#allocation3], 0
      %s212 = sshll.u32 [#allocation2], 4
      %s213 = int_to_ptr.vmem [resolvable:$true] %s212
      %s214 = sshll.u32 %s6, 4
      %s215 = int_to_ptr.hbm [resolvable:$true] %s214
      %217 = dma.vmem_to_hbm [thread:$0]  %s213, 128, %s215, [#allocation3]
    $region29: #{tpu_custom_call.1} parent=1 // pred_fallthru
      _
    // Predicated region
    $region30: #{tpu_custom_call.1} parent=1 // pred_check
      _
    $region31: #{tpu_custom_call.1} parent=1 // pred_check_branch
      %219 = sbr.rel (0) target = $region33
    $region32: #{tpu_custom_call.1} parent=1 // pred_region
      %221 = dma.done [#allocation3], 128
    $region33: #{tpu_custom_call.1} parent=1 // pred_fallthru
      _
    %222 = vsyncpa [#allocation3], 1

</llo_original>
